<compile_context>
chip_gen: v6e
topology: v6e:2x2x1
jax: 0.10.0
libtpu: 0.0.40
codegen_flags: <defaults>
</compile_context>

<pallas_src>
import functools

import jax
import jax.numpy as jnp
from jax.experimental import pallas as pl
from jax.experimental.pallas import tpu as pltpu


def _round_up(n, m):
    return ((n + m - 1) // m) * m


# ----------------------------------------------------------------------------
# Pallas kernel: one unidirectional single-layer LSTM over the whole sequence,
# single invocation.  Shapes (all padded, f32):
#   x_ref:   (T*Bp, Ip)      flattened (time, batch) on the sublane axis
#   wih_ref: (Ip, 4*Hp)      gate-blocked W_ih^T
#   whh_ref: (Hp, 4*Hp)      gate-blocked W_hh^T
#   b_ref:   (1, 4*Hp)       gate-blocked (b_ih + b_hh)
#   y_ref:   (T*Bp, Hp)
#   gx_ref:  (T*Bp, 4*Hp)    VMEM scratch for the hoisted input projection
# ----------------------------------------------------------------------------
def _lstm_seq_kernel(x_ref, wih_ref, whh_ref, b_ref, y_ref, gx_ref,
                     *, seq_len, Bp, Hp, residual):
    # Hoisted input projection: ONE big MXU matmul over all timesteps.
    gx_ref[...] = (
        jnp.dot(x_ref[...], wih_ref[...], preferred_element_type=jnp.float32)
        + b_ref[...]
    )

    def step(t, carry):
        h, c = carry
        row = pl.multiple_of(t * Bp, Bp)          # sublane-aligned dynamic offset
        # Per-step recurrent matmul only: (Bp, Hp) @ (Hp, 4Hp).
        g = gx_ref[pl.ds(row, Bp), :] + jnp.dot(
            h, whh_ref[...], preferred_element_type=jnp.float32)

        # Gate slices fall on 128-lane (vreg) boundaries thanks to Hp padding.
        i_g = jax.nn.sigmoid(g[:, 0 * Hp:1 * Hp])
        f_g = jax.nn.sigmoid(g[:, 1 * Hp:2 * Hp])
        g_g = jnp.tanh(g[:, 2 * Hp:3 * Hp])
        o_g = jax.nn.sigmoid(g[:, 3 * Hp:4 * Hp])

        c_new = f_g * c + i_g * g_g
        h_new = o_g * jnp.tanh(c_new)

        out = h_new
        if residual:
            # Fused residual: x and h share the same padded width (I == H).
            out = out + x_ref[pl.ds(row, Bp), :]

        # Lane-dense (Bp, Hp) store into the VMEM-resident output slab.
        y_ref[pl.ds(row, Bp), :] = out.astype(y_ref.dtype)
        return h_new, c_new

    h0 = jnp.zeros((Bp, Hp), jnp.float32)
    c0 = jnp.zeros((Bp, Hp), jnp.float32)
    jax.lax.fori_loop(0, seq_len, step, (h0, c0))


def lstm_layer(x, w_ih, w_hh, b_ih, b_hh, residual=False):
    """One nn.LSTM(num_layers=1, bidirectional=False) layer (optionally fused residual).

    x:    (T, B, I) float32
    w_ih: (4H, I), w_hh: (4H, H), b_ih/b_hh: (4H,)
    returns y: (T, B, H)  (= x + lstm(x) if residual, which requires I == H)
    """
    T, B, I = x.shape
    H = w_hh.shape[1]
    if residual and I != H:
        raise ValueError("residual variant requires input_size == hidden_size")

    f32 = jnp.float32
    Hp = _round_up(H, 128)
    Ip = Hp if residual else _round_up(I, 128)
    Bp = _round_up(B, 8)

    # Gate-blocked, lane-padded weights: column block [k*Hp : k*Hp+H] holds gate k.
    w_ih_t = jnp.asarray(w_ih, f32).T                       # (I, 4H)
    w_hh_t = jnp.asarray(w_hh, f32).T                       # (H, 4H)
    bias = jnp.asarray(b_ih + b_hh, f32)                    # (4H,)

    wih_p = jnp.pad(w_ih_t.reshape(I, 4, H),
                    ((0, Ip - I), (0, 0), (0, Hp - H))).reshape(Ip, 4 * Hp)
    whh_p = jnp.pad(w_hh_t.reshape(H, 4, H),
                    ((0, Hp - H), (0, 0), (0, Hp - H))).reshape(Hp, 4 * Hp)
    b_p = jnp.pad(bias.reshape(4, H), ((0, 0), (0, Hp - H))).reshape(1, 4 * Hp)

    # Pad batch/features and flatten time into the sublane axis (free XLA reshape).
    x_p = jnp.pad(x.astype(f32), ((0, 0), (0, Bp - B), (0, Ip - I)))
    x2 = x_p.reshape(T * Bp, Ip)

    kernel = functools.partial(_lstm_seq_kernel,
                               seq_len=T, Bp=Bp, Hp=Hp, residual=residual)

    y2 = pl.pallas_call(
        kernel,
        out_shape=jax.ShapeDtypeStruct((T * Bp, Hp), f32),
        grid_spec=pltpu.PrefetchScalarGridSpec(
            num_scalar_prefetch=0,
            grid=(1,),
            in_specs=[
                pl.BlockSpec((T * Bp, Ip), lambda i: (0, 0)),    # x (whole sequence)
                pl.BlockSpec((Ip, 4 * Hp), lambda i: (0, 0)),    # W_ih^T (gate-blocked)
                pl.BlockSpec((Hp, 4 * Hp), lambda i: (0, 0)),    # W_hh^T (gate-blocked)
                pl.BlockSpec((1, 4 * Hp), lambda i: (0, 0)),     # bias
            ],
            out_specs=pl.BlockSpec((T * Bp, Hp), lambda i: (0, 0)),
            scratch_shapes=[
                pltpu.VMEM((T * Bp, 4 * Hp), f32),   # hoisted gate pre-activations
            ],
        ),
        compiler_params=pltpu.CompilerParams(
            dimension_semantics=("arbitrary",),
        ),
        # TODO(synk): for very long sequences, chunk the time axis so the
        # (T*Bp, 4*Hp) pre-activation scratch fits v7x's smaller (64 MiB) VMEM.
    )(x2, wih_p, whh_p, b_p)

    y = y2.reshape(T, Bp, Hp)[:, :B, :H]
    return y.astype(x.dtype)


# ----------------------------------------------------------------------------
# Res_LSTM forward. `params` is a list of per-layer tuples (w_ih, w_hh, b_ih, b_hh).
# residual=False -> stacked multi-layer LSTM; residual=True -> x = x + lstm_l(x)
# per layer (the residual add is fused inside the kernel).
# ----------------------------------------------------------------------------
def res_lstm_forward(x, params, residual=False):
    for p in params:
        x = lstm_layer(x, *p, residual=residual)
    return x


# TODO(synk): bidirectional=True branch not implemented (reverse-direction pass +
# feature concat); the module's default configuration is unidirectional.


# ----------------------------------------------------------------------------
# Pure-JAX reference (mirrors torch.nn.LSTM equations) for validation.
# ----------------------------------------------------------------------------
def _lstm_layer_ref(x, w_ih, w_hh, b_ih, b_hh):
    T, B, I = x.shape
    H = w_hh.shape[1]

    def step(carry, x_t):
        h, c = carry
        gates = x_t @ w_ih.T + h @ w_hh.T + b_ih + b_hh
        i = jax.nn.sigmoid(gates[:, 0 * H:1 * H])
        f = jax.nn.sigmoid(gates[:, 1 * H:2 * H])
        g = jnp.tanh(gates[:, 2 * H:3 * H])
        o = jax.nn.sigmoid(gates[:, 3 * H:4 * H])
        c = f * c + i * g
        h = o * jnp.tanh(c)
        return (h, c), h

    init = (jnp.zeros((B, H), jnp.float32), jnp.zeros((B, H), jnp.float32))
    _, ys = jax.lax.scan(step, init, x)
    return ys


def _res_lstm_ref(x, params, residual=False):
    for p in params:
        if residual:
            x = x + _lstm_layer_ref(x, *p)
        else:
            x = _lstm_layer_ref(x, *p)
    return x


# ----------------------------------------------------------------------------
# Deterministic parameter init (PyTorch nn.LSTM style: U(-1/sqrt(H), 1/sqrt(H))).
# ----------------------------------------------------------------------------
def init_params(key, input_size, hidden_size, num_layers):
    k = 1.0 / jnp.sqrt(jnp.float32(hidden_size))
    params = []
    for layer in range(num_layers):
        in_sz = input_size if layer == 0 else hidden_size
        key, k1, k2, k3, k4 = jax.random.split(key, 5)
        w_ih = jax.random.uniform(k1, (4 * hidden_size, in_sz), jnp.float32, -k, k)
        w_hh = jax.random.uniform(k2, (4 * hidden_size, hidden_size), jnp.float32, -k, k)
        b_ih = jax.random.uniform(k3, (4 * hidden_size,), jnp.float32, -k, k)
        b_hh = jax.random.uniform(k4, (4 * hidden_size,), jnp.float32, -k, k)
        params.append((w_ih, w_hh, b_ih, b_hh))
    return params


if __name__ == "__main__":
    T, B = 8, 8
    input_size = 32
    hidden_size = 32          # input_size == hidden_size so residual variant is valid too
    num_layers = 2

    key = jax.random.PRNGKey(0)
    key, kx, kp = jax.random.split(key, 3)
    x = jax.random.normal(kx, (T, B, input_size), jnp.float32)   # (seq, batch, feature)
    params = init_params(kp, input_size, hidden_size, num_layers)

    # Default Res_LSTM config: residual=False -> plain stacked 2-layer LSTM.
    y = res_lstm_forward(x, params, residual=False)
    y = jax.block_until_ready(y)
    y_ref = _res_lstm_ref(x, params, residual=False)
    assert jnp.allclose(y, y_ref, atol=2e-5, rtol=2e-5)

    # Residual variant: x = x + lstm_l(x) per layer (residual add fused in-kernel).
    y_res = res_lstm_forward(x, params, residual=True)
    y_res = jax.block_until_ready(y_res)
    y_res_ref = _res_lstm_ref(x, params, residual=True)
    assert jnp.allclose(y_res, y_res_ref, atol=2e-5, rtol=2e-5)

    print("KERNEL_OK")
</pallas_src>

<mosaic_0001>
module attributes {stable_mosaic.version = 11 : i64} {
  func.func @_lstm_seq_kernel(%arg0: i32, %arg1: memref<64x128xf32, #tpu.memory_space<vmem>>, %arg2: memref<128x512xf32, #tpu.memory_space<vmem>>, %arg3: memref<128x512xf32, #tpu.memory_space<vmem>>, %arg4: memref<1x512xf32, #tpu.memory_space<vmem>>, %arg5: memref<64x128xf32, #tpu.memory_space<vmem>>, %arg6: memref<64x512xf32, #tpu.memory_space<vmem>>) attributes {dimension_semantics = [#tpu.dimension_semantics<arbitrary>], iteration_bounds = array<i64: 1>, scalar_prefetch = 0 : i64, scratch_operands = 1 : i64, tpu.core_type = #tpu.core_type<tc>, window_params = [{pipeline_mode = #tpu.pipeline_mode<synchronous>, transform_indices = @transform_0, window_bounds = array<i64: 64, 128>}, {pipeline_mode = #tpu.pipeline_mode<synchronous>, transform_indices = @transform_1, window_bounds = array<i64: 128, 512>}, {pipeline_mode = #tpu.pipeline_mode<synchronous>, transform_indices = @transform_2, window_bounds = array<i64: 128, 512>}, {pipeline_mode = #tpu.pipeline_mode<synchronous>, transform_indices = @transform_3, window_bounds = array<i64: 1, 512>}, {pipeline_mode = #tpu.pipeline_mode<synchronous>, transform_indices = @transform_4, window_bounds = array<i64: 64, 128>}]} {
    %c0 = arith.constant 0 : index
    %c0_0 = arith.constant 0 : index
    %0 = vector.load %arg1[%c0, %c0_0] : memref<64x128xf32, #tpu.memory_space<vmem>>, vector<64x128xf32>
    %c0_1 = arith.constant 0 : index
    %c0_2 = arith.constant 0 : index
    %1 = vector.load %arg2[%c0_1, %c0_2] : memref<128x512xf32, #tpu.memory_space<vmem>>, vector<128x512xf32>
    %cst = arith.constant dense<0.000000e+00> : vector<64x512xf32>
    %2 = tpu.matmul %0, %1, %cst {dimension_numbers = #tpu.dot_dimension_numbers<[1], [0], [0], [1], [0, 0, 1, 1], [], []>} : vector<64x128xf32>, vector<128x512xf32>, vector<64x512xf32> -> vector<64x512xf32>
    %c0_3 = arith.constant 0 : index
    %c0_4 = arith.constant 0 : index
    %3 = vector.load %arg4[%c0_3, %c0_4] : memref<1x512xf32, #tpu.memory_space<vmem>>, vector<1x512xf32>
    %4 = vector.broadcast %3 : vector<1x512xf32> to vector<64x512xf32>
    %5 = arith.addf %2, %4 : vector<64x512xf32>
    %c0_5 = arith.constant 0 : index
    %c0_6 = arith.constant 0 : index
    %6 = vector.load %arg6[%c0_5, %c0_6] : memref<64x512xf32, #tpu.memory_space<vmem>>, vector<64x512xf32>
    tpu.vector_store %arg6[%c0_5, %c0_6], %5 {strides = array<i32>} : memref<64x512xf32, #tpu.memory_space<vmem>>, vector<64x512xf32>,
    %cst_7 = arith.constant 0.000000e+00 : f32
    %7 = vector.broadcast %cst_7 : f32 to vector<8x128xf32>
    %cst_8 = arith.constant 0.000000e+00 : f32
    %8 = vector.broadcast %cst_8 : f32 to vector<8x128xf32>
    %c0_i32 = arith.constant 0 : i32
    %c8_i32 = arith.constant 8 : i32
    %9 = arith.addi %c0_i32, %c8_i32 : i32
    %c1_i32 = arith.constant 1 : i32
    %10:2 = scf.for %arg7 = %c0_i32 to %9 step %c1_i32 iter_args(%arg8 = %7, %arg9 = %8) -> (vector<8x128xf32>, vector<8x128xf32>)  : i32 {
      %c8_i32_10 = arith.constant 8 : i32
      %11 = arith.muli %arg7, %c8_i32_10 : i32
      %12 = tpu.assume_multiple %11, 8 : i32
      %13 = arith.index_cast %12 : i32 to index
      %c0_11 = arith.constant 0 : index
      %14 = vector.load %arg6[%13, %c0_11] : memref<64x512xf32, #tpu.memory_space<vmem>>, vector<8x512xf32>
      %c0_12 = arith.constant 0 : index
      %c0_13 = arith.constant 0 : index
      %15 = vector.load %arg3[%c0_12, %c0_13] : memref<128x512xf32, #tpu.memory_space<vmem>>, vector<128x512xf32>
      %cst_14 = arith.constant dense<0.000000e+00> : vector<8x512xf32>
      %16 = tpu.matmul %arg8, %15, %cst_14 {dimension_numbers = #tpu.dot_dimension_numbers<[1], [0], [0], [1], [0, 0, 1, 1], [], []>} : vector<8x128xf32>, vector<128x512xf32>, vector<8x512xf32> -> vector<8x512xf32>
      %17 = arith.addf %14, %16 : vector<8x512xf32>
      %18 = vector.extract_strided_slice %17 {offsets = [0, 0], sizes = [8, 128], strides = [1, 1]} : vector<8x512xf32> to vector<8x128xf32>
      %19 = arith.negf %18 : vector<8x128xf32>
      %20 = math.exp %19 : vector<8x128xf32>
      %cst_15 = arith.constant 1.000000e+00 : f32
      %21 = vector.broadcast %cst_15 : f32 to vector<8x128xf32>
      %22 = arith.addf %21, %20 : vector<8x128xf32>
      %23 = arith.divf %21, %22 : vector<8x128xf32>
      %24 = vector.extract_strided_slice %17 {offsets = [0, 128], sizes = [8, 128], strides = [1, 1]} : vector<8x512xf32> to vector<8x128xf32>
      %25 = arith.negf %24 : vector<8x128xf32>
      %26 = math.exp %25 : vector<8x128xf32>
      %cst_16 = arith.constant 1.000000e+00 : f32
      %27 = vector.broadcast %cst_16 : f32 to vector<8x128xf32>
      %28 = arith.addf %27, %26 : vector<8x128xf32>
      %29 = arith.divf %27, %28 : vector<8x128xf32>
      %30 = vector.extract_strided_slice %17 {offsets = [0, 256], sizes = [8, 128], strides = [1, 1]} : vector<8x512xf32> to vector<8x128xf32>
      %31 = math.tanh %30 : vector<8x128xf32>
      %32 = vector.extract_strided_slice %17 {offsets = [0, 384], sizes = [8, 128], strides = [1, 1]} : vector<8x512xf32> to vector<8x128xf32>
      %33 = arith.negf %32 : vector<8x128xf32>
      %34 = math.exp %33 : vector<8x128xf32>
      %cst_17 = arith.constant 1.000000e+00 : f32
      %35 = vector.broadcast %cst_17 : f32 to vector<8x128xf32>
      %36 = arith.addf %35, %34 : vector<8x128xf32>
      %37 = arith.divf %35, %36 : vector<8x128xf32>
      %38 = arith.mulf %29, %arg9 : vector<8x128xf32>
      %39 = arith.mulf %23, %31 : vector<8x128xf32>
      %40 = arith.addf %38, %39 : vector<8x128xf32>
      %41 = math.tanh %40 : vector<8x128xf32>
      %42 = arith.mulf %37, %41 : vector<8x128xf32>
      %43 = arith.index_cast %12 : i32 to index
      %c0_18 = arith.constant 0 : index
      %44 = vector.load %arg5[%43, %c0_18] : memref<64x128xf32, #tpu.memory_space<vmem>>, vector<8x128xf32>
      tpu.vector_store %arg5[%43, %c0_18], %42 {strides = array<i32>} : memref<64x128xf32, #tpu.memory_space<vmem>>, vector<8x128xf32>,
      scf.yield %42, %40 : vector<8x128xf32>, vector<8x128xf32>
    }
    %c8_i32_9 = arith.constant 8 : i32
    return
  }
  func.func @transform_0(%arg0: i32) -> (i32, i32) {
    %c0_i32 = arith.constant 0 : i32
    %c0_i32_0 = arith.constant 0 : i32
    %c0_i32_1 = arith.constant 0 : i32
    return %c0_i32, %c0_i32_0 : i32, i32
  }
  func.func @transform_1(%arg0: i32) -> (i32, i32) {
    %c0_i32 = arith.constant 0 : i32
    %c0_i32_0 = arith.constant 0 : i32
    %c0_i32_1 = arith.constant 0 : i32
    return %c0_i32, %c0_i32_0 : i32, i32
  }
  func.func @transform_2(%arg0: i32) -> (i32, i32) {
    %c0_i32 = arith.constant 0 : i32
    %c0_i32_0 = arith.constant 0 : i32
    %c0_i32_1 = arith.constant 0 : i32
    return %c0_i32, %c0_i32_0 : i32, i32
  }
  func.func @transform_3(%arg0: i32) -> (i32, i32) {
    %c0_i32 = arith.constant 0 : i32
    %c0_i32_0 = arith.constant 0 : i32
    %c0_i32_1 = arith.constant 0 : i32
    return %c0_i32, %c0_i32_0 : i32, i32
  }
  func.func @transform_4(%arg0: i32) -> (i32, i32) {
    %c0_i32 = arith.constant 0 : i32
    %c0_i32_0 = arith.constant 0 : i32
    %c0_i32_1 = arith.constant 0 : i32
    return %c0_i32, %c0_i32_0 : i32, i32
  }
}

</mosaic_0001>

<llo_original>
// kernel: tpu_custom_call.1
$region0: #{tpu_custom_call.1}
  #allocation0 [shape = 'u32[]', space=smem, size = 0x4, offset = 0x4, fixed_abs, tag = 'smem constant byte address 0x4 - core index']
  #allocation1 [shape = 'u32[144,128]{1,0:T(1,128)}', space=vmem, size = 0x12000, scoped, tag = 'internal scratch']
  #allocation2 [shape = 'f32[64,512]{1,0:T(8,128)}', space=vmem, size = 0x20000, scoped, tag = 'scratch operand']
  %s0 = inlined_call_operand.hbm [shape: f32[64,128], index: 0, kind: input, shape index: {}]
  %s1 = inlined_call_operand.hbm [shape: f32[128,512], index: 1, kind: input, shape index: {}]
  %s2 = inlined_call_operand.hbm [shape: f32[128,512], index: 2, kind: input, shape index: {}]
  %s3 = inlined_call_operand.vmem [shape: f32[1,512], index: 3, kind: input, shape index: {}]
  %s4 = inlined_call_operand.hbm [shape: f32[64,128], index: 4, kind: output, shape index: {}]
  %s5 = sld [smem:[#allocation0]]
  $region45: #{tpu_custom_call.1} parent=0
    _
  %s7 = ssub.s32 1, %s5
  %s8 = scalar_select 0, %s7, %s5
  $region1: #{tpu_custom_call.1} parent=0
    #allocation3 [shape = 'u8[32768]{0}', space=vmem, size = 0x8000, scoped, tag = 'input window, operand 0, single buffered']
    #allocation4 [shape = 's32[1]{0}', space=sflag, size = 0x4, scoped, tag = 'scoped memory for tpu_custom_call.1']
    #allocation5 [shape = 's32[1]{0}', space=sflag, size = 0x4, scoped, tag = 'scoped memory for tpu_custom_call.1']
    #allocation6 [shape = 'u8[262144]{0}', space=vmem, size = 0x40000, scoped, tag = 'input window, operand 1, single buffered']
    #allocation7 [shape = 's32[1]{0}', space=sflag, size = 0x4, scoped, tag = 'scoped memory for tpu_custom_call.1']
    #allocation8 [shape = 'u8[262144]{0}', space=vmem, size = 0x40000, scoped, tag = 'input window, operand 2, single buffered']
    #allocation9 [shape = 'u8[32768]{0}', space=vmem, size = 0x8000, scoped, tag = 'output window, operand 0, single buffered']
    %9 = vsyncpa [#allocation4], 0
    %10 = vsyncpa [#allocation7], 0
    %11 = vsyncpa [#allocation5], 0
    // Predicated region
    $region2: #{tpu_custom_call.1} parent=1 // pred_check
      _
    $region3: #{tpu_custom_call.1} parent=1 // pred_check_branch
      %13 = sbr.rel (0) target = $region5
    $region4: #{tpu_custom_call.1} parent=1 // pred_region
      %s15 = ssub.s32 1024, 1024
      %16 = vsyncadd [#allocation4], %s15
      %s17 = sshll.u32 [#allocation3], 4
      %s18 = int_to_ptr.vmem [resolvable:$true] %s17
      %23 = dma.hbm_to_vmem [thread:$0]  %s0, 1024, %s18, [#allocation4], 128, 128, 8
    $region5: #{tpu_custom_call.1} parent=1 // pred_fallthru
      _
    // Predicated region
    $region6: #{tpu_custom_call.1} parent=1 // pred_check
      _
    $region7: #{tpu_custom_call.1} parent=1 // pred_check_branch
      %25 = sbr.rel (0) target = $region9
    $region8: #{tpu_custom_call.1} parent=1 // pred_region
      %s27 = ssub.s32 8192, 8192
      %28 = vsyncadd [#allocation7], %s27
      %s29 = sshll.u32 [#allocation6], 4
      %s30 = int_to_ptr.vmem [resolvable:$true] %s29
      %35 = dma.hbm_to_vmem [thread:$0]  %s1, 8192, %s30, [#allocation7], 512, 512, 32
    $region9: #{tpu_custom_call.1} parent=1 // pred_fallthru
      _
    // Predicated region
    $region10: #{tpu_custom_call.1} parent=1 // pred_check
      _
    $region11: #{tpu_custom_call.1} parent=1 // pred_check_branch
      %37 = sbr.rel (0) target = $region13
    $region12: #{tpu_custom_call.1} parent=1 // pred_region
      %s39 = ssub.s32 8192, 8192
      %40 = vsyncadd [#allocation7], %s39
      %s41 = sshll.u32 [#allocation8], 4
      %s42 = int_to_ptr.vmem [resolvable:$true] %s41
      %47 = dma.hbm_to_vmem [thread:$0]  %s2, 8192, %s42, [#allocation7], 512, 512, 32
    $region13: #{tpu_custom_call.1} parent=1 // pred_fallthru
      _
    // Predicated region
    $region14: #{tpu_custom_call.1} parent=1 // pred_check
      _
    $region15: #{tpu_custom_call.1} parent=1 // pred_check_branch
      %49 = sbr.rel (0) target = $region17
    $region16: #{tpu_custom_call.1} parent=1 // pred_region
      _
    $region17: #{tpu_custom_call.1} parent=1 // pred_fallthru
      _
    // Predicated region
    $region18: #{tpu_custom_call.1} parent=1 // pred_check
      _
    $region19: #{tpu_custom_call.1} parent=1 // pred_check_branch
      %51 = sbr.rel (0) target = $region21
    $region20: #{tpu_custom_call.1} parent=1 // pred_region
      %52 = dma.done [#allocation4], 1024
    $region21: #{tpu_custom_call.1} parent=1 // pred_fallthru
      _
    // Predicated region
    $region22: #{tpu_custom_call.1} parent=1 // pred_check
      _
    $region23: #{tpu_custom_call.1} parent=1 // pred_check_branch
      %54 = sbr.rel (0) target = $region25
    $region24: #{tpu_custom_call.1} parent=1 // pred_region
      %55 = dma.done [#allocation7], 8192
    $region25: #{tpu_custom_call.1} parent=1 // pred_fallthru
      _
    // Predicated region
    $region26: #{tpu_custom_call.1} parent=1 // pred_check
      _
    $region27: #{tpu_custom_call.1} parent=1 // pred_check_branch
      %57 = sbr.rel (0) target = $region29
    $region28: #{tpu_custom_call.1} parent=1 // pred_region
      %58 = dma.done [#allocation7], 8192
    $region29: #{tpu_custom_call.1} parent=1 // pred_fallthru
      _
    %v59 = vld [vmem:[#allocation3] sm:$0xff]
    %v60 = vld [vmem:[#allocation3 + $0x8] sm:$0xff]
    %v61 = vld [vmem:[#allocation3 + $0x10] sm:$0xff]
    %v62 = vld [vmem:[#allocation3 + $0x18] sm:$0xff]
    %v63 = vld [vmem:[#allocation3 + $0x20] sm:$0xff]
    %v64 = vld [vmem:[#allocation3 + $0x28] sm:$0xff]
    %v65 = vld [vmem:[#allocation3 + $0x30] sm:$0xff]
    %v66 = vld [vmem:[#allocation3 + $0x38] sm:$0xff]
    %v67 = vld [vmem:[#allocation6] sm:$0xff]
    %v68 = vld [vmem:[#allocation6 + $0x8] sm:$0xff]
    %v69 = vld [vmem:[#allocation6 + $0x10] sm:$0xff]
    %v70 = vld [vmem:[#allocation6 + $0x18] sm:$0xff]
    %v71 = vld [vmem:[#allocation6 + $0x20] sm:$0xff]
    %v72 = vld [vmem:[#allocation6 + $0x28] sm:$0xff]
    %v73 = vld [vmem:[#allocation6 + $0x30] sm:$0xff]
    %v74 = vld [vmem:[#allocation6 + $0x38] sm:$0xff]
    %v75 = vld [vmem:[#allocation6 + $0x40] sm:$0xff]
    %v76 = vld [vmem:[#allocation6 + $0x48] sm:$0xff]
    %v77 = vld [vmem:[#allocation6 + $0x50] sm:$0xff]
    %v78 = vld [vmem:[#allocation6 + $0x58] sm:$0xff]
    %v79 = vld [vmem:[#allocation6 + $0x60] sm:$0xff]
    %v80 = vld [vmem:[#allocation6 + $0x68] sm:$0xff]
    %v81 = vld [vmem:[#allocation6 + $0x70] sm:$0xff]
    %v82 = vld [vmem:[#allocation6 + $0x78] sm:$0xff]
    %v83 = vld [vmem:[#allocation6 + $0x80] sm:$0xff]
    %v84 = vld [vmem:[#allocation6 + $0x88] sm:$0xff]
    %v85 = vld [vmem:[#allocation6 + $0x90] sm:$0xff]
    %v86 = vld [vmem:[#allocation6 + $0x98] sm:$0xff]
    %v87 = vld [vmem:[#allocation6 + $0xa0] sm:$0xff]
    %v88 = vld [vmem:[#allocation6 + $0xa8] sm:$0xff]
    %v89 = vld [vmem:[#allocation6 + $0xb0] sm:$0xff]
    %v90 = vld [vmem:[#allocation6 + $0xb8] sm:$0xff]
    %v91 = vld [vmem:[#allocation6 + $0xc0] sm:$0xff]
    %v92 = vld [vmem:[#allocation6 + $0xc8] sm:$0xff]
    %v93 = vld [vmem:[#allocation6 + $0xd0] sm:$0xff]
    %v94 = vld [vmem:[#allocation6 + $0xd8] sm:$0xff]
    %v95 = vld [vmem:[#allocation6 + $0xe0] sm:$0xff]
    %v96 = vld [vmem:[#allocation6 + $0xe8] sm:$0xff]
    %v97 = vld [vmem:[#allocation6 + $0xf0] sm:$0xff]
    %v98 = vld [vmem:[#allocation6 + $0xf8] sm:$0xff]
    %v99 = vld [vmem:[#allocation6 + $0x100] sm:$0xff]
    %v100 = vld [vmem:[#allocation6 + $0x108] sm:$0xff]
    %v101 = vld [vmem:[#allocation6 + $0x110] sm:$0xff]
    %v102 = vld [vmem:[#allocation6 + $0x118] sm:$0xff]
    %v103 = vld [vmem:[#allocation6 + $0x120] sm:$0xff]
    %v104 = vld [vmem:[#allocation6 + $0x128] sm:$0xff]
    %v105 = vld [vmem:[#allocation6 + $0x130] sm:$0xff]
    %v106 = vld [vmem:[#allocation6 + $0x138] sm:$0xff]
    %v107 = vld [vmem:[#allocation6 + $0x140] sm:$0xff]
    %v108 = vld [vmem:[#allocation6 + $0x148] sm:$0xff]
    %v109 = vld [vmem:[#allocation6 + $0x150] sm:$0xff]
    %v110 = vld [vmem:[#allocation6 + $0x158] sm:$0xff]
    %v111 = vld [vmem:[#allocation6 + $0x160] sm:$0xff]
    %v112 = vld [vmem:[#allocation6 + $0x168] sm:$0xff]
    %v113 = vld [vmem:[#allocation6 + $0x170] sm:$0xff]
    %v114 = vld [vmem:[#allocation6 + $0x178] sm:$0xff]
    %v115 = vld [vmem:[#allocation6 + $0x180] sm:$0xff]
    %v116 = vld [vmem:[#allocation6 + $0x188] sm:$0xff]
    %v117 = vld [vmem:[#allocation6 + $0x190] sm:$0xff]
    %v118 = vld [vmem:[#allocation6 + $0x198] sm:$0xff]
    %v119 = vld [vmem:[#allocation6 + $0x1a0] sm:$0xff]
    %v120 = vld [vmem:[#allocation6 + $0x1a8] sm:$0xff]
    %v121 = vld [vmem:[#allocation6 + $0x1b0] sm:$0xff]
    %v122 = vld [vmem:[#allocation6 + $0x1b8] sm:$0xff]
    %v123 = vld [vmem:[#allocation6 + $0x1c0] sm:$0xff]
    %v124 = vld [vmem:[#allocation6 + $0x1c8] sm:$0xff]
    %v125 = vld [vmem:[#allocation6 + $0x1d0] sm:$0xff]
    %v126 = vld [vmem:[#allocation6 + $0x1d8] sm:$0xff]
    %v127 = vld [vmem:[#allocation6 + $0x1e0] sm:$0xff]
    %v128 = vld [vmem:[#allocation6 + $0x1e8] sm:$0xff]
    %v129 = vld [vmem:[#allocation6 + $0x1f0] sm:$0xff]
    %v130 = vld [vmem:[#allocation6 + $0x1f8] sm:$0xff]
    %v131 = vld [vmem:[%s3] sm:$0xf]
    %v133 = vlaneseq
    %v134 = vshrl.u32 %v133, 7
    %v135 = vsub.s32 0, %v134
    %v136 = vrot.slane %v131, %v135
    %v137 = vlaneseq
    %v138 = vshrl.u32 %v137, 7
    %v139 = vsub.s32 1, %v138
    %v140 = vrot.slane %v131, %v139
    %v141 = vlaneseq
    %v142 = vshrl.u32 %v141, 7
    %v143 = vsub.s32 2, %v142
    %v144 = vrot.slane %v131, %v143
    %v145 = vlaneseq
    %v146 = vshrl.u32 %v145, 7
    %v147 = vsub.s32 3, %v146
    %v148 = vrot.slane %v131, %v147
    %153 = vmatprep.subr.mxu0 %v128
    %154 = vmatpush1.msra.mxu0 %v127
    %155 = vmatprep.subr.mxu0 %v124
    %156 = vmatpush1.msra.mxu0 %v123
    %157 = vmatprep.subr.mxu0 %v120
    %158 = vmatpush1.msra.mxu0 %v119
    %159 = vmatprep.subr.mxu0 %v116
    %160 = vmatpush1.msra.mxu0 %v115
    %161 = vmatprep.subr.mxu0 %v112
    %162 = vmatpush1.msra.mxu0 %v111
    %163 = vmatprep.subr.mxu0 %v108
    %164 = vmatpush1.msra.mxu0 %v107
    %165 = vmatprep.subr.mxu0 %v104
    %166 = vmatpush1.msra.mxu0 %v103
    %167 = vmatprep.subr.mxu0 %v100
    %168 = vmatpush1.msra.mxu0 %v99
    %169 = vmatprep.subr.mxu0 %v96
    %170 = vmatpush1.msra.mxu0 %v95
    %171 = vmatprep.subr.mxu0 %v92
    %172 = vmatpush1.msra.mxu0 %v91
    %173 = vmatprep.subr.mxu0 %v88
    %174 = vmatpush1.msra.mxu0 %v87
    %175 = vmatprep.subr.mxu0 %v84
    %176 = vmatpush1.msra.mxu0 %v83
    %177 = vmatprep.subr.mxu0 %v80
    %178 = vmatpush1.msra.mxu0 %v79
    %179 = vmatprep.subr.mxu0 %v76
    %180 = vmatpush1.msra.mxu0 %v75
    %181 = vmatprep.subr.mxu0 %v72
    %182 = vmatpush1.msra.mxu0 %v71
    %183 = vmatprep.subr.mxu0 %v68
    %184 = vmatpush1.msra.mxu0 %v67
    %185 = vmatprep.subr.mxu0 0.0
    %186 = vmatpush2.msra.mxu0 0.0
    %187 = vmatprep.subr.mxu0 0.0
    %188 = vmatpush2.msra.mxu0 0.0
    %189 = vmatprep.subr.mxu0 0.0
    %190 = vmatpush2.msra.mxu0 0.0
    %191 = vmatprep.subr.mxu0 0.0
    %192 = vmatpush2.msra.mxu0 0.0
    %193 = vmatprep.subr.mxu0 0.0
    %194 = vmatpush2.msra.mxu0 0.0
    %195 = vmatprep.subr.mxu0 0.0
    %196 = vmatpush2.msra.mxu0 0.0
    %197 = vmatprep.subr.mxu0 0.0
    %198 = vmatpush2.msra.mxu0 0.0
    %199 = vmatprep.subr.mxu0 0.0
    %200 = vmatpush2.msra.mxu0 0.0
    %201 = vmatprep.subr.mxu0 0.0
    %202 = vmatpush2.msra.mxu0 0.0
    %203 = vmatprep.subr.mxu0 0.0
    %204 = vmatpush2.msra.mxu0 0.0
    %205 = vmatprep.subr.mxu0 0.0
    %206 = vmatpush2.msra.mxu0 0.0
    %207 = vmatprep.subr.mxu0 0.0
    %208 = vmatpush2.msra.mxu0 0.0
    %209 = vmatprep.subr.mxu0 0.0
    %210 = vmatpush2.msra.mxu0 0.0
    %211 = vmatprep.subr.mxu0 0.0
    %212 = vmatpush2.msra.mxu0 0.0
    %213 = vmatprep.subr.mxu0 0.0
    %214 = vmatpush2.msra.mxu0 0.0
    %215 = vmatprep.subr.mxu0 0.0
    %216 = vmatpush2.msra.mxu0 0.0
    %217 = vmatprep.mubr.f32.mxu0 0.0
    %218 = vmatmul.mubr.f32.gmra.mxu0 %v59
    %v219 = vpop.f32.mrf.mxu0
    %v220 = vadd.f32 %v136, %v219
    %v221 = vpop.f32.mrf.mxu0
    %v222 = vadd.f32 %v140, %v221
    %223 = vmatprep.mubr.f32.mxu0 0.0
    %224 = vmatmul.mubr.f32.gmra.mxu0 %v60
    %v225 = vpop.f32.mrf.mxu0
    %v226 = vadd.f32 %v136, %v225
    %v227 = vpop.f32.mrf.mxu0
    %v228 = vadd.f32 %v140, %v227
    %229 = vmatprep.mubr.f32.mxu0 0.0
    %230 = vmatmul.mubr.f32.gmra.mxu0 %v61
    %v231 = vpop.f32.mrf.mxu0
    %v232 = vadd.f32 %v136, %v231
    %v233 = vpop.f32.mrf.mxu0
    %v234 = vadd.f32 %v140, %v233
    %235 = vmatprep.mubr.f32.mxu0 0.0
    %236 = vmatmul.mubr.f32.gmra.mxu0 %v62
    %v237 = vpop.f32.mrf.mxu0
    %v238 = vadd.f32 %v136, %v237
    %v239 = vpop.f32.mrf.mxu0
    %v240 = vadd.f32 %v140, %v239
    %241 = vmatprep.mubr.f32.mxu0 0.0
    %242 = vmatmul.mubr.f32.gmra.mxu0 %v63
    %v243 = vpop.f32.mrf.mxu0
    %v244 = vadd.f32 %v136, %v243
    %v245 = vpop.f32.mrf.mxu0
    %v246 = vadd.f32 %v140, %v245
    %247 = vmatprep.mubr.f32.mxu0 0.0
    %248 = vmatmul.mubr.f32.gmra.mxu0 %v64
    %v249 = vpop.f32.mrf.mxu0
    %v250 = vadd.f32 %v136, %v249
    %v251 = vpop.f32.mrf.mxu0
    %v252 = vadd.f32 %v140, %v251
    %253 = vmatprep.mubr.f32.mxu0 0.0
    %254 = vmatmul.mubr.f32.gmra.mxu0 %v65
    %v255 = vpop.f32.mrf.mxu0
    %v256 = vadd.f32 %v136, %v255
    %v257 = vpop.f32.mrf.mxu0
    %v258 = vadd.f32 %v140, %v257
    %259 = vmatprep.mubr.f32.mxu0 0.0
    %260 = vmatmul.mubr.f32.gmra.mxu0 %v66
    %v261 = vpop.f32.mrf.mxu0
    %v262 = vadd.f32 %v136, %v261
    %v263 = vpop.f32.mrf.mxu0
    %v264 = vadd.f32 %v140, %v263
    %265 = vdwg.mxu0
    %266 = vmatprep.subr.mxu0 %v130
    %267 = vmatpush1.msra.mxu0 %v129
    %268 = vmatprep.subr.mxu0 %v126
    %269 = vmatpush1.msra.mxu0 %v125
    %270 = vmatprep.subr.mxu0 %v122
    %271 = vmatpush1.msra.mxu0 %v121
    %272 = vmatprep.subr.mxu0 %v118
    %273 = vmatpush1.msra.mxu0 %v117
    %274 = vmatprep.subr.mxu0 %v114
    %275 = vmatpush1.msra.mxu0 %v113
    %276 = vmatprep.subr.mxu0 %v110
    %277 = vmatpush1.msra.mxu0 %v109
    %278 = vmatprep.subr.mxu0 %v106
    %279 = vmatpush1.msra.mxu0 %v105
    %280 = vmatprep.subr.mxu0 %v102
    %281 = vmatpush1.msra.mxu0 %v101
    %282 = vmatprep.subr.mxu0 %v98
    %283 = vmatpush1.msra.mxu0 %v97
    %284 = vmatprep.subr.mxu0 %v94
    %285 = vmatpush1.msra.mxu0 %v93
    %286 = vmatprep.subr.mxu0 %v90
    %287 = vmatpush1.msra.mxu0 %v89
    %288 = vmatprep.subr.mxu0 %v86
    %289 = vmatpush1.msra.mxu0 %v85
    %290 = vmatprep.subr.mxu0 %v82
    %291 = vmatpush1.msra.mxu0 %v81
    %292 = vmatprep.subr.mxu0 %v78
    %293 = vmatpush1.msra.mxu0 %v77
    %294 = vmatprep.subr.mxu0 %v74
    %295 = vmatpush1.msra.mxu0 %v73
    %296 = vmatprep.subr.mxu0 %v70
    %297 = vmatpush1.msra.mxu0 %v69
    %298 = vmatprep.subr.mxu0 0.0
    %299 = vmatpush2.msra.mxu0 0.0
    %300 = vmatprep.subr.mxu0 0.0
    %301 = vmatpush2.msra.mxu0 0.0
    %302 = vmatprep.subr.mxu0 0.0
    %303 = vmatpush2.msra.mxu0 0.0
    %304 = vmatprep.subr.mxu0 0.0
    %305 = vmatpush2.msra.mxu0 0.0
    %306 = vmatprep.subr.mxu0 0.0
    %307 = vmatpush2.msra.mxu0 0.0
    %308 = vmatprep.subr.mxu0 0.0
    %309 = vmatpush2.msra.mxu0 0.0
    %310 = vmatprep.subr.mxu0 0.0
    %311 = vmatpush2.msra.mxu0 0.0
    %312 = vmatprep.subr.mxu0 0.0
    %313 = vmatpush2.msra.mxu0 0.0
    %314 = vmatprep.subr.mxu0 0.0
    %315 = vmatpush2.msra.mxu0 0.0
    %316 = vmatprep.subr.mxu0 0.0
    %317 = vmatpush2.msra.mxu0 0.0
    %318 = vmatprep.subr.mxu0 0.0
    %319 = vmatpush2.msra.mxu0 0.0
    %320 = vmatprep.subr.mxu0 0.0
    %321 = vmatpush2.msra.mxu0 0.0
    %322 = vmatprep.subr.mxu0 0.0
    %323 = vmatpush2.msra.mxu0 0.0
    %324 = vmatprep.subr.mxu0 0.0
    %325 = vmatpush2.msra.mxu0 0.0
    %326 = vmatprep.subr.mxu0 0.0
    %327 = vmatpush2.msra.mxu0 0.0
    %328 = vmatprep.subr.mxu0 0.0
    %329 = vmatpush2.msra.mxu0 0.0
    %330 = vmatprep.mubr.f32.mxu0 0.0
    %331 = vmatmul.mubr.f32.gmra.mxu0 %v59
    %v332 = vpop.f32.mrf.mxu0
    %v333 = vadd.f32 %v144, %v332
    %v334 = vpop.f32.mrf.mxu0
    %v335 = vadd.f32 %v148, %v334
    %336 = vmatprep.mubr.f32.mxu0 0.0
    %337 = vmatmul.mubr.f32.gmra.mxu0 %v60
    %v338 = vpop.f32.mrf.mxu0
    %v339 = vadd.f32 %v144, %v338
    %v340 = vpop.f32.mrf.mxu0
    %v341 = vadd.f32 %v148, %v340
    %342 = vmatprep.mubr.f32.mxu0 0.0
    %343 = vmatmul.mubr.f32.gmra.mxu0 %v61
    %v344 = vpop.f32.mrf.mxu0
    %v345 = vadd.f32 %v144, %v344
    %v346 = vpop.f32.mrf.mxu0
    %v347 = vadd.f32 %v148, %v346
    %348 = vmatprep.mubr.f32.mxu0 0.0
    %349 = vmatmul.mubr.f32.gmra.mxu0 %v62
    %v350 = vpop.f32.mrf.mxu0
    %v351 = vadd.f32 %v144, %v350
    %v352 = vpop.f32.mrf.mxu0
    %v353 = vadd.f32 %v148, %v352
    %354 = vmatprep.mubr.f32.mxu0 0.0
    %355 = vmatmul.mubr.f32.gmra.mxu0 %v63
    %v356 = vpop.f32.mrf.mxu0
    %v357 = vadd.f32 %v144, %v356
    %v358 = vpop.f32.mrf.mxu0
    %v359 = vadd.f32 %v148, %v358
    %360 = vmatprep.mubr.f32.mxu0 0.0
    %361 = vmatmul.mubr.f32.gmra.mxu0 %v64
    %v362 = vpop.f32.mrf.mxu0
    %v363 = vadd.f32 %v144, %v362
    %v364 = vpop.f32.mrf.mxu0
    %v365 = vadd.f32 %v148, %v364
    %366 = vmatprep.mubr.f32.mxu0 0.0
    %367 = vmatmul.mubr.f32.gmra.mxu0 %v65
    %v368 = vpop.f32.mrf.mxu0
    %v369 = vadd.f32 %v144, %v368
    %v370 = vpop.f32.mrf.mxu0
    %v371 = vadd.f32 %v148, %v370
    %372 = vmatprep.mubr.f32.mxu0 0.0
    %373 = vmatmul.mubr.f32.gmra.mxu0 %v66
    %v374 = vpop.f32.mrf.mxu0
    %v375 = vadd.f32 %v144, %v374
    %v376 = vpop.f32.mrf.mxu0
    %v377 = vadd.f32 %v148, %v376
    %378 = vdwg.mxu0
    %379 = vst [vmem:[#allocation2] sm:$0xff] %v220
    %380 = vst [vmem:[#allocation2 + $0x8] sm:$0xff] %v222
    %381 = vst [vmem:[#allocation2 + $0x10] sm:$0xff] %v333
    %382 = vst [vmem:[#allocation2 + $0x18] sm:$0xff] %v335
    %383 = vst [vmem:[#allocation2 + $0x20] sm:$0xff] %v226
    %384 = vst [vmem:[#allocation2 + $0x28] sm:$0xff] %v228
    %385 = vst [vmem:[#allocation2 + $0x30] sm:$0xff] %v339
    %386 = vst [vmem:[#allocation2 + $0x38] sm:$0xff] %v341
    %387 = vst [vmem:[#allocation2 + $0x40] sm:$0xff] %v232
    %388 = vst [vmem:[#allocation2 + $0x48] sm:$0xff] %v234
    %389 = vst [vmem:[#allocation2 + $0x50] sm:$0xff] %v345
    %390 = vst [vmem:[#allocation2 + $0x58] sm:$0xff] %v347
    %391 = vst [vmem:[#allocation2 + $0x60] sm:$0xff] %v238
    %392 = vst [vmem:[#allocation2 + $0x68] sm:$0xff] %v240
    %393 = vst [vmem:[#allocation2 + $0x70] sm:$0xff] %v351
    %394 = vst [vmem:[#allocation2 + $0x78] sm:$0xff] %v353
    %395 = vst [vmem:[#allocation2 + $0x80] sm:$0xff] %v244
    %396 = vst [vmem:[#allocation2 + $0x88] sm:$0xff] %v246
    %397 = vst [vmem:[#allocation2 + $0x90] sm:$0xff] %v357
    %398 = vst [vmem:[#allocation2 + $0x98] sm:$0xff] %v359
    %399 = vst [vmem:[#allocation2 + $0xa0] sm:$0xff] %v250
    %400 = vst [vmem:[#allocation2 + $0xa8] sm:$0xff] %v252
    %401 = vst [vmem:[#allocation2 + $0xb0] sm:$0xff] %v363
    %402 = vst [vmem:[#allocation2 + $0xb8] sm:$0xff] %v365
    %403 = vst [vmem:[#allocation2 + $0xc0] sm:$0xff] %v256
    %404 = vst [vmem:[#allocation2 + $0xc8] sm:$0xff] %v258
    %405 = vst [vmem:[#allocation2 + $0xd0] sm:$0xff] %v369
    %406 = vst [vmem:[#allocation2 + $0xd8] sm:$0xff] %v371
    %407 = vst [vmem:[#allocation2 + $0xe0] sm:$0xff] %v262
    %408 = vst [vmem:[#allocation2 + $0xe8] sm:$0xff] %v264
    %409 = vst [vmem:[#allocation2 + $0xf0] sm:$0xff] %v375
    %410 = vst [vmem:[#allocation2 + $0xf8] sm:$0xff] %v377
    loop: start=0, step=1, limit=8
    $region30: #{tpu_custom_call.1} parent=1 // loop_pre_header
      _
    $region31: #{tpu_custom_call.1} parent=1 // loop_header
      %s412 = sphi 0, %s416
      %p413 = scmp.ge.s32.totalorder %s412, 8
      %v417 = vphi 0.0, %v662
      %v418 = vphi 0.0, %v660
    $region32: #{tpu_custom_call.1} parent=1 // loop_header_branch
      %415 = sbr.rel (%p413) target = $region36
    $region33: #{tpu_custom_call.1} parent=1 // loop_body
      %s419 = smul.u32 %s412, 8
      %s420 = sshra.s32 %s419, 3
      %s421 = sand.u32 %s419, 7
      %s422 = smul.u32 %s420, 4
      %s423 = smul.addr %s422, 8
      %s424 = scalar_lea.vmem [#allocation2], %s423
      %v425 = vld [vmem:[%s424] sm:$0xff]
      %v426 = vld [vmem:[%s424 + $0x8] sm:$0xff]
      %v427 = vld [vmem:[%s424 + $0x10] sm:$0xff]
      %v428 = vld [vmem:[%s424 + $0x18] sm:$0xff]
      %v429 = vld [vmem:[#allocation8] sm:$0xff]
      %v430 = vld [vmem:[#allocation8 + $0x8] sm:$0xff]
      %v431 = vld [vmem:[#allocation8 + $0x10] sm:$0xff]
      %v432 = vld [vmem:[#allocation8 + $0x18] sm:$0xff]
      %v433 = vld [vmem:[#allocation8 + $0x20] sm:$0xff]
      %v434 = vld [vmem:[#allocation8 + $0x28] sm:$0xff]
      %v435 = vld [vmem:[#allocation8 + $0x30] sm:$0xff]
      %v436 = vld [vmem:[#allocation8 + $0x38] sm:$0xff]
      %v437 = vld [vmem:[#allocation8 + $0x40] sm:$0xff]
      %v438 = vld [vmem:[#allocation8 + $0x48] sm:$0xff]
      %v439 = vld [vmem:[#allocation8 + $0x50] sm:$0xff]
      %v440 = vld [vmem:[#allocation8 + $0x58] sm:$0xff]
      %v441 = vld [vmem:[#allocation8 + $0x60] sm:$0xff]
      %v442 = vld [vmem:[#allocation8 + $0x68] sm:$0xff]
      %v443 = vld [vmem:[#allocation8 + $0x70] sm:$0xff]
      %v444 = vld [vmem:[#allocation8 + $0x78] sm:$0xff]
      %v445 = vld [vmem:[#allocation8 + $0x80] sm:$0xff]
      %v446 = vld [vmem:[#allocation8 + $0x88] sm:$0xff]
      %v447 = vld [vmem:[#allocation8 + $0x90] sm:$0xff]
      %v448 = vld [vmem:[#allocation8 + $0x98] sm:$0xff]
      %v449 = vld [vmem:[#allocation8 + $0xa0] sm:$0xff]
      %v450 = vld [vmem:[#allocation8 + $0xa8] sm:$0xff]
      %v451 = vld [vmem:[#allocation8 + $0xb0] sm:$0xff]
      %v452 = vld [vmem:[#allocation8 + $0xb8] sm:$0xff]
      %v453 = vld [vmem:[#allocation8 + $0xc0] sm:$0xff]
      %v454 = vld [vmem:[#allocation8 + $0xc8] sm:$0xff]
      %v455 = vld [vmem:[#allocation8 + $0xd0] sm:$0xff]
      %v456 = vld [vmem:[#allocation8 + $0xd8] sm:$0xff]
      %v457 = vld [vmem:[#allocation8 + $0xe0] sm:$0xff]
      %v458 = vld [vmem:[#allocation8 + $0xe8] sm:$0xff]
      %v459 = vld [vmem:[#allocation8 + $0xf0] sm:$0xff]
      %v460 = vld [vmem:[#allocation8 + $0xf8] sm:$0xff]
      %v461 = vld [vmem:[#allocation8 + $0x100] sm:$0xff]
      %v462 = vld [vmem:[#allocation8 + $0x108] sm:$0xff]
      %v463 = vld [vmem:[#allocation8 + $0x110] sm:$0xff]
      %v464 = vld [vmem:[#allocation8 + $0x118] sm:$0xff]
      %v465 = vld [vmem:[#allocation8 + $0x120] sm:$0xff]
      %v466 = vld [vmem:[#allocation8 + $0x128] sm:$0xff]
      %v467 = vld [vmem:[#allocation8 + $0x130] sm:$0xff]
      %v468 = vld [vmem:[#allocation8 + $0x138] sm:$0xff]
      %v469 = vld [vmem:[#allocation8 + $0x140] sm:$0xff]
      %v470 = vld [vmem:[#allocation8 + $0x148] sm:$0xff]
      %v471 = vld [vmem:[#allocation8 + $0x150] sm:$0xff]
      %v472 = vld [vmem:[#allocation8 + $0x158] sm:$0xff]
      %v473 = vld [vmem:[#allocation8 + $0x160] sm:$0xff]
      %v474 = vld [vmem:[#allocation8 + $0x168] sm:$0xff]
      %v475 = vld [vmem:[#allocation8 + $0x170] sm:$0xff]
      %v476 = vld [vmem:[#allocation8 + $0x178] sm:$0xff]
      %v477 = vld [vmem:[#allocation8 + $0x180] sm:$0xff]
      %v478 = vld [vmem:[#allocation8 + $0x188] sm:$0xff]
      %v479 = vld [vmem:[#allocation8 + $0x190] sm:$0xff]
      %v480 = vld [vmem:[#allocation8 + $0x198] sm:$0xff]
      %v481 = vld [vmem:[#allocation8 + $0x1a0] sm:$0xff]
      %v482 = vld [vmem:[#allocation8 + $0x1a8] sm:$0xff]
      %v483 = vld [vmem:[#allocation8 + $0x1b0] sm:$0xff]
      %v484 = vld [vmem:[#allocation8 + $0x1b8] sm:$0xff]
      %v485 = vld [vmem:[#allocation8 + $0x1c0] sm:$0xff]
      %v486 = vld [vmem:[#allocation8 + $0x1c8] sm:$0xff]
      %v487 = vld [vmem:[#allocation8 + $0x1d0] sm:$0xff]
      %v488 = vld [vmem:[#allocation8 + $0x1d8] sm:$0xff]
      %v489 = vld [vmem:[#allocation8 + $0x1e0] sm:$0xff]
      %v490 = vld [vmem:[#allocation8 + $0x1e8] sm:$0xff]
      %v491 = vld [vmem:[#allocation8 + $0x1f0] sm:$0xff]
      %v492 = vld [vmem:[#allocation8 + $0x1f8] sm:$0xff]
      %493 = vmatprep.subr.mxu0 %v490
      %494 = vmatpush1.msra.mxu0 %v489
      %495 = vmatprep.subr.mxu0 %v486
      %496 = vmatpush1.msra.mxu0 %v485
      %497 = vmatprep.subr.mxu0 %v482
      %498 = vmatpush1.msra.mxu0 %v481
      %499 = vmatprep.subr.mxu0 %v478
      %500 = vmatpush1.msra.mxu0 %v477
      %501 = vmatprep.subr.mxu0 %v474
      %502 = vmatpush1.msra.mxu0 %v473
      %503 = vmatprep.subr.mxu0 %v470
      %504 = vmatpush1.msra.mxu0 %v469
      %505 = vmatprep.subr.mxu0 %v466
      %506 = vmatpush1.msra.mxu0 %v465
      %507 = vmatprep.subr.mxu0 %v462
      %508 = vmatpush1.msra.mxu0 %v461
      %509 = vmatprep.subr.mxu0 %v458
      %510 = vmatpush1.msra.mxu0 %v457
      %511 = vmatprep.subr.mxu0 %v454
      %512 = vmatpush1.msra.mxu0 %v453
      %513 = vmatprep.subr.mxu0 %v450
      %514 = vmatpush1.msra.mxu0 %v449
      %515 = vmatprep.subr.mxu0 %v446
      %516 = vmatpush1.msra.mxu0 %v445
      %517 = vmatprep.subr.mxu0 %v442
      %518 = vmatpush1.msra.mxu0 %v441
      %519 = vmatprep.subr.mxu0 %v438
      %520 = vmatpush1.msra.mxu0 %v437
      %521 = vmatprep.subr.mxu0 %v434
      %522 = vmatpush1.msra.mxu0 %v433
      %523 = vmatprep.subr.mxu0 %v430
      %524 = vmatpush1.msra.mxu0 %v429
      %525 = vmatprep.subr.mxu0 0.0
      %526 = vmatpush2.msra.mxu0 0.0
      %527 = vmatprep.subr.mxu0 0.0
      %528 = vmatpush2.msra.mxu0 0.0
      %529 = vmatprep.subr.mxu0 0.0
      %530 = vmatpush2.msra.mxu0 0.0
      %531 = vmatprep.subr.mxu0 0.0
      %532 = vmatpush2.msra.mxu0 0.0
      %533 = vmatprep.subr.mxu0 0.0
      %534 = vmatpush2.msra.mxu0 0.0
      %535 = vmatprep.subr.mxu0 0.0
      %536 = vmatpush2.msra.mxu0 0.0
      %537 = vmatprep.subr.mxu0 0.0
      %538 = vmatpush2.msra.mxu0 0.0
      %539 = vmatprep.subr.mxu0 0.0
      %540 = vmatpush2.msra.mxu0 0.0
      %541 = vmatprep.subr.mxu0 0.0
      %542 = vmatpush2.msra.mxu0 0.0
      %543 = vmatprep.subr.mxu0 0.0
      %544 = vmatpush2.msra.mxu0 0.0
      %545 = vmatprep.subr.mxu0 0.0
      %546 = vmatpush2.msra.mxu0 0.0
      %547 = vmatprep.subr.mxu0 0.0
      %548 = vmatpush2.msra.mxu0 0.0
      %549 = vmatprep.subr.mxu0 0.0
      %550 = vmatpush2.msra.mxu0 0.0
      %551 = vmatprep.subr.mxu0 0.0
      %552 = vmatpush2.msra.mxu0 0.0
      %553 = vmatprep.subr.mxu0 0.0
      %554 = vmatpush2.msra.mxu0 0.0
      %555 = vmatprep.subr.mxu0 0.0
      %556 = vmatpush2.msra.mxu0 0.0
      %557 = vmatprep.mubr.f32.mxu0 0.0
      %558 = vmatmul.mubr.f32.gmra.mxu0 %v417
      %v559 = vpop.f32.mrf.mxu0
      %v560 = vadd.f32 0.0, %v559
      %v561 = vpop.f32.mrf.mxu0
      %v562 = vadd.f32 0.0, %v561
      %563 = vdwg.mxu0
      %564 = vmatprep.subr.mxu0 %v492
      %565 = vmatpush1.msra.mxu0 %v491
      %566 = vmatprep.subr.mxu0 %v488
      %567 = vmatpush1.msra.mxu0 %v487
      %568 = vmatprep.subr.mxu0 %v484
      %569 = vmatpush1.msra.mxu0 %v483
      %570 = vmatprep.subr.mxu0 %v480
      %571 = vmatpush1.msra.mxu0 %v479
      %572 = vmatprep.subr.mxu0 %v476
      %573 = vmatpush1.msra.mxu0 %v475
      %574 = vmatprep.subr.mxu0 %v472
      %575 = vmatpush1.msra.mxu0 %v471
      %576 = vmatprep.subr.mxu0 %v468
      %577 = vmatpush1.msra.mxu0 %v467
      %578 = vmatprep.subr.mxu0 %v464
      %579 = vmatpush1.msra.mxu0 %v463
      %580 = vmatprep.subr.mxu0 %v460
      %581 = vmatpush1.msra.mxu0 %v459
      %582 = vmatprep.subr.mxu0 %v456
      %583 = vmatpush1.msra.mxu0 %v455
      %584 = vmatprep.subr.mxu0 %v452
      %585 = vmatpush1.msra.mxu0 %v451
      %586 = vmatprep.subr.mxu0 %v448
      %587 = vmatpush1.msra.mxu0 %v447
      %588 = vmatprep.subr.mxu0 %v444
      %589 = vmatpush1.msra.mxu0 %v443
      %590 = vmatprep.subr.mxu0 %v440
      %591 = vmatpush1.msra.mxu0 %v439
      %592 = vmatprep.subr.mxu0 %v436
      %593 = vmatpush1.msra.mxu0 %v435
      %594 = vmatprep.subr.mxu0 %v432
      %595 = vmatpush1.msra.mxu0 %v431
      %596 = vmatprep.subr.mxu0 0.0
      %597 = vmatpush2.msra.mxu0 0.0
      %598 = vmatprep.subr.mxu0 0.0
      %599 = vmatpush2.msra.mxu0 0.0
      %600 = vmatprep.subr.mxu0 0.0
      %601 = vmatpush2.msra.mxu0 0.0
      %602 = vmatprep.subr.mxu0 0.0
      %603 = vmatpush2.msra.mxu0 0.0
      %604 = vmatprep.subr.mxu0 0.0
      %605 = vmatpush2.msra.mxu0 0.0
      %606 = vmatprep.subr.mxu0 0.0
      %607 = vmatpush2.msra.mxu0 0.0
      %608 = vmatprep.subr.mxu0 0.0
      %609 = vmatpush2.msra.mxu0 0.0
      %610 = vmatprep.subr.mxu0 0.0
      %611 = vmatpush2.msra.mxu0 0.0
      %612 = vmatprep.subr.mxu0 0.0
      %613 = vmatpush2.msra.mxu0 0.0
      %614 = vmatprep.subr.mxu0 0.0
      %615 = vmatpush2.msra.mxu0 0.0
      %616 = vmatprep.subr.mxu0 0.0
      %617 = vmatpush2.msra.mxu0 0.0
      %618 = vmatprep.subr.mxu0 0.0
      %619 = vmatpush2.msra.mxu0 0.0
      %620 = vmatprep.subr.mxu0 0.0
      %621 = vmatpush2.msra.mxu0 0.0
      %622 = vmatprep.subr.mxu0 0.0
      %623 = vmatpush2.msra.mxu0 0.0
      %624 = vmatprep.subr.mxu0 0.0
      %625 = vmatpush2.msra.mxu0 0.0
      %626 = vmatprep.subr.mxu0 0.0
      %627 = vmatpush2.msra.mxu0 0.0
      %628 = vmatprep.mubr.f32.mxu0 0.0
      %629 = vmatmul.mubr.f32.gmra.mxu0 %v417
      %v630 = vpop.f32.mrf.mxu0
      %v631 = vadd.f32 0.0, %v630
      %v632 = vpop.f32.mrf.mxu0
      %v633 = vadd.f32 0.0, %v632
      %634 = vdwg.mxu0
      %v635 = vadd.f32 %v425, %v560
      %v636 = vadd.f32 %v426, %v562
      %v637 = vadd.f32 %v427, %v631
      %v638 = vadd.f32 %v428, %v633
      %v639 = vxor.u32 %v635, 2147483648
      %v640 = vmul.f32 %v639, 1.442695
      %v641 = vpow.pop %v640
      %v642 = vadd.f32 %v641, 1.0
      %v643 = vrcp.pop %v642
      %v644 = vmul.f32 1.0, %v643
      %v645 = vxor.u32 %v636, 2147483648
      %v646 = vmul.f32 %v645, 1.442695
      %v647 = vpow.pop %v646
      %v648 = vadd.f32 %v647, 1.0
      %v649 = vrcp.pop %v648
      %v650 = vmul.f32 1.0, %v649
      %v651 = vtanh.pop %v637
      %v652 = vxor.u32 %v638, 2147483648
      %v653 = vmul.f32 %v652, 1.442695
      %v654 = vpow.pop %v653
      %v655 = vadd.f32 %v654, 1.0
      %v656 = vrcp.pop %v655
      %v657 = vmul.f32 1.0, %v656
      %v658 = vmul.f32 %v650, %v418
      %v659 = vmul.f32 %v644, %v651
      %v660 = vadd.f32 %v658, %v659
      %v661 = vtanh.pop %v660
      %v662 = vmul.f32 %v657, %v661
      %s663 = scalar_lea.vmem [#allocation9], %s419
      %664 = vst [vmem:[%s663] sm:$0xff] %v662
    $region34: #{tpu_custom_call.1} parent=1 // loop_footer
      %s416 = sadd.s32 1, %s412
    $region35: #{tpu_custom_call.1} parent=1 // loop_footer_branch
      %411 = sbr.rel target = $region31
    $region36: #{tpu_custom_call.1} parent=1 // loop_exit
      _
    // Predicated region
    $region37: #{tpu_custom_call.1} parent=1 // pred_check
      _
    $region38: #{tpu_custom_call.1} parent=1 // pred_check_branch
      %666 = sbr.rel (0) target = $region40
    $region39: #{tpu_custom_call.1} parent=1 // pred_region
      %s668 = ssub.s32 1024, 1024
      %669 = vsyncadd [#allocation5], %s668
      %s670 = sshll.u32 [#allocation9], 4
      %s671 = int_to_ptr.vmem [resolvable:$true] %s670
      %676 = dma.vmem_to_hbm [thread:$0]  %s671, 1024, %s4, [#allocation5], 128, 128, 8
    $region40: #{tpu_custom_call.1} parent=1 // pred_fallthru
      _
    // Predicated region
    $region41: #{tpu_custom_call.1} parent=1 // pred_check
      _
    $region42: #{tpu_custom_call.1} parent=1 // pred_check_branch
      %678 = sbr.rel (0) target = $region44
    $region43: #{tpu_custom_call.1} parent=1 // pred_region
      %679 = dma.done [#allocation5], 1024
    $region44: #{tpu_custom_call.1} parent=1 // pred_fallthru
      _
    %680 = vsyncpa [#allocation4], 1
    %681 = vsyncpa [#allocation7], 1
    %682 = vsyncpa [#allocation5], 1

</llo_original>
